<compile_context>
chip_gen: v7x
topology: tpu7x:2x2x1
jax: 0.10.0
libtpu: 0.0.40
codegen_flags: <defaults>
</compile_context>

<pallas_src>
import functools

import jax
import jax.numpy as jnp
from jax.experimental import pallas as pl
from jax.experimental.pallas import tpu as pltpu

LANES = 128          # vreg lane width (minor dim)
TM_MAX = 1024        # max rows per grid step (1024*128*4B = 512 KiB f32 block)
NUM_CORES = 2        # leading "parallel" grid axis; 2 TCs on v7x, no-op on v5e/v6e
_SENTINEL = -1e4     # finite pad logit: sigmoid(-1e4)==0 and bce(-1e4, 0)==0


def _round_up(x, m):
    return ((x + m - 1) // m) * m


def _sublane_multiple(dtype):
    # Packed sublane requirement per dtype width (f32:8, 16-bit:16, 8-bit:32).
    return {1: 32, 2: 16, 4: 8}[jnp.dtype(dtype).itemsize]


def _make_kernel(tm, bpc, rows_valid):
    r = tm // 8  # number of (8,128) vreg slabs per input block

    def kernel(p_ref, t_ref, bce_ref, inter_ref, union_ref):
        c = pl.program_id(0)   # core split (parallel)
        i = pl.program_id(1)   # row-block reduction axis (arbitrary)

        @pl.when(i == 0)
        def _init():
            bce_ref[...] = jnp.zeros_like(bce_ref)
            inter_ref[...] = jnp.zeros_like(inter_ref)
            union_ref[...] = jnp.zeros_like(union_ref)

        base_row = (c * bpc + i) * tm          # intended (un-clamped) first row
        x_raw = p_ref[...].astype(jnp.float32)  # logits (tm, 128)
        t_raw = t_ref[...].astype(jnp.float32)  # targets in [0, 1]

        def accumulate(x, t):
            # sigmoid via tanh: single EUP op, no divide, no sign select.
            sig = 0.5 * jnp.tanh(0.5 * x) + 0.5
            # Stable BCE-with-logits:
            #   log1p(exp(-|x|)) == -log(sigmoid(|x|)) == -log(max(sig, 1-sig))
            bce = jnp.maximum(x, 0.0) - x * t - jnp.log(jnp.maximum(sig, 1.0 - sig))

            # Per-step partial reduction to one vreg: reshape splits the major
            # (sublane-block) dim only -> pure vector adds, no XLU, no full-tile
            # accumulator read-modify-write.
            def fold(a):
                return a.reshape(r, 8, LANES).sum(axis=0)

            bce_ref[...] += fold(bce)
            inter_ref[...] += fold(sig * t)
            union_ref[...] += fold(sig + t)     # sum(sig) + sum(t) folded together

        # Only the last valid row-block (rows % tm != 0) and core-overshoot
        # steps need masking; keep the common full-block path mask-free.
        is_partial = base_row + tm > rows_valid

        @pl.when(jnp.logical_not(is_partial))
        def _full_block():
            accumulate(x_raw, t_raw)

        @pl.when(is_partial)
        def _partial_block():
            row_ids = jax.lax.broadcasted_iota(jnp.int32, (tm, LANES), 0) + base_row
            valid = row_ids < rows_valid
            # Mask BEFORE any transcendental: OOB VMEM garbage may be Inf/NaN.
            accumulate(jnp.where(valid, x_raw, _SENTINEL),
                       jnp.where(valid, t_raw, 0.0))

    return kernel


@functools.partial(jax.jit, static_argnames=("bce_weight", "dice_weight", "smooth"))
def dice_bce_loss(pred, target, bce_weight=0.5, dice_weight=0.5, smooth=1e-6):
    """Pallas TPU implementation of DiceBCELoss.forward (returns scalar f32)."""
    n = pred.size
    p = pred.reshape(-1)
    t = target.reshape(-1)

    # Stream 16-bit logits and 8-/16-bit targets natively (upcast in-kernel).
    if p.dtype not in (jnp.float32, jnp.bfloat16, jnp.float16):
        p = p.astype(jnp.float32)
    if t.dtype not in (jnp.float32, jnp.bfloat16, jnp.float16, jnp.int8, jnp.uint8):
        t = t.astype(jnp.float32)

    # Pad the flat stream only when unavoidable: to a multiple of 128 lanes and
    # at least 8 rows.  Pad logits are a finite sentinel (sigmoid==0, bce==0),
    # pad targets are 0, so padding contributes nothing to any sum.
    padded = max(_round_up(n, LANES), 8 * LANES)
    if padded != n:
        # TODO(synk): a fully copy-free path for numel % 128 != 0 would need
        # element-level (1-D) blocking; the aligned common case is zero-copy.
        p = jnp.pad(p, (0, padded - n), constant_values=_SENTINEL)
        t = jnp.pad(t, (0, padded - n), constant_values=0)
    rows = padded // LANES

    sub = max(_sublane_multiple(p.dtype), _sublane_multiple(t.dtype))
    if rows < sub:
        # Tiny input: upcast narrow streams so an 8-row-aligned tile is legal.
        p = p.astype(jnp.float32)
        t = t.astype(jnp.float32)
        sub = 8
    tm = min(TM_MAX, (rows // sub) * sub)      # multiple of sub, <= rows, >= 8

    nblocks = -(-rows // tm)                   # total row blocks (cdiv)
    bpc = -(-nblocks // NUM_CORES)             # row blocks per core (cdiv)
    grid = (NUM_CORES, bpc)

    p2d = p.reshape(rows, LANES)
    t2d = t.reshape(rows, LANES)

    def in_map(c, i):
        # Clamp so overshoot steps (uneven core split) re-read a valid block;
        # the kernel's row mask zeroes their contribution.
        return (jnp.minimum(c * bpc + i, nblocks - 1), 0)

    in_spec = pl.BlockSpec((tm, LANES), in_map)
    acc_spec = pl.BlockSpec((8, LANES), lambda c, i: (c, 0))
    acc_shape = jax.ShapeDtypeStruct((NUM_CORES * 8, LANES), jnp.float32)

    bce_acc, inter_acc, union_acc = pl.pallas_call(
        _make_kernel(tm, bpc, rows),
        out_shape=(acc_shape, acc_shape, acc_shape),
        grid_spec=pltpu.PrefetchScalarGridSpec(
            num_scalar_prefetch=0,
            grid=grid,
            in_specs=[in_spec, in_spec],
            out_specs=(acc_spec, acc_spec, acc_spec),
        ),
        compiler_params=pltpu.CompilerParams(
            dimension_semantics=("parallel", "arbitrary"),
            vmem_limit_bytes=32 * 1024 * 1024,
        ),
    )(p2d, t2d)

    # Tiny cross-lane reductions + scalar epilogue: one fused, trivial XLA op.
    bce_mean = jnp.sum(bce_acc) / n
    intersection = jnp.sum(inter_acc)
    union = jnp.sum(union_acc)
    dice = (2.0 * intersection + smooth) / (union + smooth)
    return bce_weight * bce_mean + dice_weight * (1.0 - dice)


def _reference(pred, target, bce_weight=0.5, dice_weight=0.5, smooth=1e-6):
    x = pred.astype(jnp.float32)
    t = target.astype(jnp.float32)
    bce = jnp.mean(jnp.maximum(x, 0.0) - x * t + jnp.log1p(jnp.exp(-jnp.abs(x))))
    sig = jax.nn.sigmoid(x)
    inter = jnp.sum(sig * t)
    union = jnp.sum(sig) + jnp.sum(t)
    dice = (2.0 * inter + smooth) / (union + smooth)
    return bce_weight * bce + dice_weight * (1.0 - dice)


if __name__ == "__main__":
    key = jax.random.PRNGKey(0)
    k1, k2, k3, k4, k5, k6, k7, k8 = jax.random.split(key, 8)

    # 1. Aligned NCHW segmentation logits + binary targets (zero-copy path).
    x1 = jax.random.normal(k1, (2, 4, 16, 16), dtype=jnp.float32)
    t1 = (jax.random.uniform(k2, (2, 4, 16, 16)) > 0.5).astype(jnp.float32)
    l1 = jax.block_until_ready(dice_bce_loss(x1, t1))
    r1 = _reference(x1, t1)
    assert jnp.allclose(l1, r1, rtol=1e-4, atol=1e-5), (l1, r1)

    # 2. Unaligned size: 128-pad + in-kernel partial-block masking.
    x2 = jax.random.normal(k3, (2, 4, 20, 17), dtype=jnp.float32)
    t2 = (jax.random.uniform(k4, (2, 4, 20, 17)) > 0.5).astype(jnp.float32)
    l2 = jax.block_until_ready(dice_bce_loss(x2, t2))
    r2 = _reference(x2, t2)
    assert jnp.allclose(l2, r2, rtol=1e-4, atol=1e-5), (l2, r2)

    # 3. Larger case: multi-block accumulation + both lanes of the leading
    #    "parallel" grid axis doing real work.
    x3 = jax.random.normal(k5, (4, 4, 128, 128), dtype=jnp.float32)
    t3 = (jax.random.uniform(k6, (4, 4, 128, 128)) > 0.5).astype(jnp.float32)
    l3 = jax.block_until_ready(dice_bce_loss(x3, t3))
    r3 = _reference(x3, t3)
    assert jnp.allclose(l3, r3, rtol=1e-4, atol=1e-5), (l3, r3)

    # 4. Mixed narrow dtypes streamed natively: bf16 logits + int8 binary mask.
    x4 = jax.random.normal(k7, (2, 4, 32, 32), dtype=jnp.bfloat16)
    t4 = (jax.random.uniform(k8, (2, 4, 32, 32)) > 0.5).astype(jnp.int8)
    l4 = jax.block_until_ready(dice_bce_loss(x4, t4))
    r4 = _reference(x4, t4)
    assert jnp.allclose(l4, r4, rtol=1e-4, atol=1e-5), (l4, r4)

    print("KERNEL_OK")
</pallas_src>

<mosaic_0001>
module attributes {stable_mosaic.version = 11 : i64} {
  func.func @kernel(%arg0: i32, %arg1: i32, %arg2: memref<16x128xf32, #tpu.memory_space<vmem>>, %arg3: memref<16x128xf32, #tpu.memory_space<vmem>>, %arg4: memref<8x128xf32, #tpu.memory_space<vmem>>, %arg5: memref<8x128xf32, #tpu.memory_space<vmem>>, %arg6: memref<8x128xf32, #tpu.memory_space<vmem>>) attributes {dimension_semantics = [#tpu.dimension_semantics<parallel>, #tpu.dimension_semantics<arbitrary>], iteration_bounds = array<i64: 2, 1>, scalar_prefetch = 0 : i64, scratch_operands = 0 : i64, tpu.core_type = #tpu.core_type<tc>, window_params = [{transform_indices = @transform_0, window_bounds = array<i64: 16, 128>}, {transform_indices = @transform_1, window_bounds = array<i64: 16, 128>}, {transform_indices = @transform_2, window_bounds = array<i64: 8, 128>}, {transform_indices = @transform_3, window_bounds = array<i64: 8, 128>}, {transform_indices = @transform_4, window_bounds = array<i64: 8, 128>}]} {
    %c0_i32 = arith.constant 0 : i32
    %0 = arith.cmpi eq, %arg1, %c0_i32 : i32
    %1 = arith.extui %0 : i1 to i32
    %c0_i32_0 = arith.constant 0 : i32
    %2 = arith.cmpi ne, %1, %c0_i32_0 : i32
    scf.if %2 {
      %cst = arith.constant 0.000000e+00 : f32
      %15 = vector.broadcast %cst : f32 to vector<8x128xf32>
      %c0_8 = arith.constant 0 : index
      %c0_9 = arith.constant 0 : index
      %16 = vector.load %arg4[%c0_8, %c0_9] : memref<8x128xf32, #tpu.memory_space<vmem>>, vector<8x128xf32>
      tpu.vector_store %arg4[%c0_8, %c0_9], %15 {strides = array<i32>} : memref<8x128xf32, #tpu.memory_space<vmem>>, vector<8x128xf32>,
      %cst_10 = arith.constant 0.000000e+00 : f32
      %17 = vector.broadcast %cst_10 : f32 to vector<8x128xf32>
      %c0_11 = arith.constant 0 : index
      %c0_12 = arith.constant 0 : index
      %18 = vector.load %arg5[%c0_11, %c0_12] : memref<8x128xf32, #tpu.memory_space<vmem>>, vector<8x128xf32>
      tpu.vector_store %arg5[%c0_11, %c0_12], %17 {strides = array<i32>} : memref<8x128xf32, #tpu.memory_space<vmem>>, vector<8x128xf32>,
      %cst_13 = arith.constant 0.000000e+00 : f32
      %19 = vector.broadcast %cst_13 : f32 to vector<8x128xf32>
      %c0_14 = arith.constant 0 : index
      %c0_15 = arith.constant 0 : index
      %20 = vector.load %arg6[%c0_14, %c0_15] : memref<8x128xf32, #tpu.memory_space<vmem>>, vector<8x128xf32>
      tpu.vector_store %arg6[%c0_14, %c0_15], %19 {strides = array<i32>} : memref<8x128xf32, #tpu.memory_space<vmem>>, vector<8x128xf32>,
    } else {
    }
    %c1_i32 = arith.constant 1 : i32
    %3 = arith.muli %arg0, %c1_i32 : i32
    %4 = arith.addi %3, %arg1 : i32
    %c16_i32 = arith.constant 16 : i32
    %5 = arith.muli %4, %c16_i32 : i32
    %c0 = arith.constant 0 : index
    %c0_1 = arith.constant 0 : index
    %6 = vector.load %arg2[%c0, %c0_1] : memref<16x128xf32, #tpu.memory_space<vmem>>, vector<16x128xf32>
    %c0_2 = arith.constant 0 : index
    %c0_3 = arith.constant 0 : index
    %7 = vector.load %arg3[%c0_2, %c0_3] : memref<16x128xf32, #tpu.memory_space<vmem>>, vector<16x128xf32>
    %c16_i32_4 = arith.constant 16 : i32
    %8 = arith.addi %5, %c16_i32_4 : i32
    %c16_i32_5 = arith.constant 16 : i32
    %9 = arith.cmpi sgt, %8, %c16_i32_5 : i32
    %true = arith.constant true
    %10 = arith.xori %9, %true : i1
    %11 = arith.extui %10 : i1 to i32
    %c0_i32_6 = arith.constant 0 : i32
    %12 = arith.cmpi ne, %11, %c0_i32_6 : i32
    scf.if %12 {
      %cst = arith.constant 5.000000e-01 : f32
      %15 = vector.broadcast %cst : f32 to vector<16x128xf32>
      %16 = arith.mulf %15, %6 : vector<16x128xf32>
      %17 = math.tanh %16 : vector<16x128xf32>
      %cst_8 = arith.constant 5.000000e-01 : f32
      %18 = vector.broadcast %cst_8 : f32 to vector<16x128xf32>
      %19 = arith.mulf %18, %17 : vector<16x128xf32>
      %cst_9 = arith.constant 5.000000e-01 : f32
      %20 = vector.broadcast %cst_9 : f32 to vector<16x128xf32>
      %21 = arith.addf %19, %20 : vector<16x128xf32>
      %cst_10 = arith.constant 0.000000e+00 : f32
      %22 = vector.broadcast %cst_10 : f32 to vector<16x128xf32>
      %23 = arith.maximumf %6, %22 : vector<16x128xf32>
      %24 = arith.mulf %6, %7 : vector<16x128xf32>
      %25 = arith.subf %23, %24 : vector<16x128xf32>
      %cst_11 = arith.constant 1.000000e+00 : f32
      %26 = vector.broadcast %cst_11 : f32 to vector<16x128xf32>
      %27 = arith.subf %26, %21 : vector<16x128xf32>
      %28 = arith.maximumf %21, %27 : vector<16x128xf32>
      %29 = math.log %28 : vector<16x128xf32>
      %30 = arith.subf %25, %29 : vector<16x128xf32>
      %c0_12 = arith.constant 0 : index
      %c0_13 = arith.constant 0 : index
      %31 = vector.load %arg4[%c0_12, %c0_13] : memref<8x128xf32, #tpu.memory_space<vmem>>, vector<8x128xf32>
      %32 = vector.shape_cast %30 : vector<16x128xf32> to vector<2x8x128xf32>
      %cst_14 = arith.constant dense<0.000000e+00> : vector<8x128xf32>
      %33 = vector.multi_reduction <add>, %32, %cst_14 [0] : vector<2x8x128xf32> to vector<8x128xf32>
      %34 = arith.addf %31, %33 : vector<8x128xf32>
      %c0_15 = arith.constant 0 : index
      %c0_16 = arith.constant 0 : index
      %35 = vector.load %arg4[%c0_15, %c0_16] : memref<8x128xf32, #tpu.memory_space<vmem>>, vector<8x128xf32>
      tpu.vector_store %arg4[%c0_15, %c0_16], %34 {strides = array<i32>} : memref<8x128xf32, #tpu.memory_space<vmem>>, vector<8x128xf32>,
      %c0_17 = arith.constant 0 : index
      %c0_18 = arith.constant 0 : index
      %36 = vector.load %arg5[%c0_17, %c0_18] : memref<8x128xf32, #tpu.memory_space<vmem>>, vector<8x128xf32>
      %37 = arith.mulf %21, %7 : vector<16x128xf32>
      %38 = vector.shape_cast %37 : vector<16x128xf32> to vector<2x8x128xf32>
      %cst_19 = arith.constant dense<0.000000e+00> : vector<8x128xf32>
      %39 = vector.multi_reduction <add>, %38, %cst_19 [0] : vector<2x8x128xf32> to vector<8x128xf32>
      %40 = arith.addf %36, %39 : vector<8x128xf32>
      %c0_20 = arith.constant 0 : index
      %c0_21 = arith.constant 0 : index
      %41 = vector.load %arg5[%c0_20, %c0_21] : memref<8x128xf32, #tpu.memory_space<vmem>>, vector<8x128xf32>
      tpu.vector_store %arg5[%c0_20, %c0_21], %40 {strides = array<i32>} : memref<8x128xf32, #tpu.memory_space<vmem>>, vector<8x128xf32>,
      %c0_22 = arith.constant 0 : index
      %c0_23 = arith.constant 0 : index
      %42 = vector.load %arg6[%c0_22, %c0_23] : memref<8x128xf32, #tpu.memory_space<vmem>>, vector<8x128xf32>
      %43 = arith.addf %21, %7 : vector<16x128xf32>
      %44 = vector.shape_cast %43 : vector<16x128xf32> to vector<2x8x128xf32>
      %cst_24 = arith.constant dense<0.000000e+00> : vector<8x128xf32>
      %45 = vector.multi_reduction <add>, %44, %cst_24 [0] : vector<2x8x128xf32> to vector<8x128xf32>
      %46 = arith.addf %42, %45 : vector<8x128xf32>
      %c0_25 = arith.constant 0 : index
      %c0_26 = arith.constant 0 : index
      %47 = vector.load %arg6[%c0_25, %c0_26] : memref<8x128xf32, #tpu.memory_space<vmem>>, vector<8x128xf32>
      tpu.vector_store %arg6[%c0_25, %c0_26], %46 {strides = array<i32>} : memref<8x128xf32, #tpu.memory_space<vmem>>, vector<8x128xf32>,
    } else {
    }
    %13 = arith.extui %9 : i1 to i32
    %c0_i32_7 = arith.constant 0 : i32
    %14 = arith.cmpi ne, %13, %c0_i32_7 : i32
    scf.if %14 {
      %15 = tpu.iota {dimensions = array<i32: 0>} : vector<16x128xi32>
      %16 = vector.broadcast %5 : i32 to vector<16x128xi32>
      %17 = arith.addi %15, %16 : vector<16x128xi32>
      %c16_i32_8 = arith.constant 16 : i32
      %18 = vector.broadcast %c16_i32_8 : i32 to vector<16x128xi32>
      %19 = arith.cmpi slt, %17, %18 : vector<16x128xi32>
      %cst = arith.constant -1.000000e+04 : f32
      %20 = vector.broadcast %cst : f32 to vector<16x128xf32>
      %21 = arith.select %19, %6, %20 : vector<16x128xi1>, vector<16x128xf32>
      %cst_9 = arith.constant 0.000000e+00 : f32
      %22 = vector.broadcast %cst_9 : f32 to vector<16x128xf32>
      %23 = arith.select %19, %7, %22 : vector<16x128xi1>, vector<16x128xf32>
      %cst_10 = arith.constant 5.000000e-01 : f32
      %24 = vector.broadcast %cst_10 : f32 to vector<16x128xf32>
      %25 = arith.mulf %24, %21 : vector<16x128xf32>
      %26 = math.tanh %25 : vector<16x128xf32>
      %cst_11 = arith.constant 5.000000e-01 : f32
      %27 = vector.broadcast %cst_11 : f32 to vector<16x128xf32>
      %28 = arith.mulf %27, %26 : vector<16x128xf32>
      %cst_12 = arith.constant 5.000000e-01 : f32
      %29 = vector.broadcast %cst_12 : f32 to vector<16x128xf32>
      %30 = arith.addf %28, %29 : vector<16x128xf32>
      %cst_13 = arith.constant 0.000000e+00 : f32
      %31 = vector.broadcast %cst_13 : f32 to vector<16x128xf32>
      %32 = arith.maximumf %21, %31 : vector<16x128xf32>
      %33 = arith.mulf %21, %23 : vector<16x128xf32>
      %34 = arith.subf %32, %33 : vector<16x128xf32>
      %cst_14 = arith.constant 1.000000e+00 : f32
      %35 = vector.broadcast %cst_14 : f32 to vector<16x128xf32>
      %36 = arith.subf %35, %30 : vector<16x128xf32>
      %37 = arith.maximumf %30, %36 : vector<16x128xf32>
      %38 = math.log %37 : vector<16x128xf32>
      %39 = arith.subf %34, %38 : vector<16x128xf32>
      %c0_15 = arith.constant 0 : index
      %c0_16 = arith.constant 0 : index
      %40 = vector.load %arg4[%c0_15, %c0_16] : memref<8x128xf32, #tpu.memory_space<vmem>>, vector<8x128xf32>
      %41 = vector.shape_cast %39 : vector<16x128xf32> to vector<2x8x128xf32>
      %cst_17 = arith.constant dense<0.000000e+00> : vector<8x128xf32>
      %42 = vector.multi_reduction <add>, %41, %cst_17 [0] : vector<2x8x128xf32> to vector<8x128xf32>
      %43 = arith.addf %40, %42 : vector<8x128xf32>
      %c0_18 = arith.constant 0 : index
      %c0_19 = arith.constant 0 : index
      %44 = vector.load %arg4[%c0_18, %c0_19] : memref<8x128xf32, #tpu.memory_space<vmem>>, vector<8x128xf32>
      tpu.vector_store %arg4[%c0_18, %c0_19], %43 {strides = array<i32>} : memref<8x128xf32, #tpu.memory_space<vmem>>, vector<8x128xf32>,
      %c0_20 = arith.constant 0 : index
      %c0_21 = arith.constant 0 : index
      %45 = vector.load %arg5[%c0_20, %c0_21] : memref<8x128xf32, #tpu.memory_space<vmem>>, vector<8x128xf32>
      %46 = arith.mulf %30, %23 : vector<16x128xf32>
      %47 = vector.shape_cast %46 : vector<16x128xf32> to vector<2x8x128xf32>
      %cst_22 = arith.constant dense<0.000000e+00> : vector<8x128xf32>
      %48 = vector.multi_reduction <add>, %47, %cst_22 [0] : vector<2x8x128xf32> to vector<8x128xf32>
      %49 = arith.addf %45, %48 : vector<8x128xf32>
      %c0_23 = arith.constant 0 : index
      %c0_24 = arith.constant 0 : index
      %50 = vector.load %arg5[%c0_23, %c0_24] : memref<8x128xf32, #tpu.memory_space<vmem>>, vector<8x128xf32>
      tpu.vector_store %arg5[%c0_23, %c0_24], %49 {strides = array<i32>} : memref<8x128xf32, #tpu.memory_space<vmem>>, vector<8x128xf32>,
      %c0_25 = arith.constant 0 : index
      %c0_26 = arith.constant 0 : index
      %51 = vector.load %arg6[%c0_25, %c0_26] : memref<8x128xf32, #tpu.memory_space<vmem>>, vector<8x128xf32>
      %52 = arith.addf %30, %23 : vector<16x128xf32>
      %53 = vector.shape_cast %52 : vector<16x128xf32> to vector<2x8x128xf32>
      %cst_27 = arith.constant dense<0.000000e+00> : vector<8x128xf32>
      %54 = vector.multi_reduction <add>, %53, %cst_27 [0] : vector<2x8x128xf32> to vector<8x128xf32>
      %55 = arith.addf %51, %54 : vector<8x128xf32>
      %c0_28 = arith.constant 0 : index
      %c0_29 = arith.constant 0 : index
      %56 = vector.load %arg6[%c0_28, %c0_29] : memref<8x128xf32, #tpu.memory_space<vmem>>, vector<8x128xf32>
      tpu.vector_store %arg6[%c0_28, %c0_29], %55 {strides = array<i32>} : memref<8x128xf32, #tpu.memory_space<vmem>>, vector<8x128xf32>,
    } else {
    }
    return
  }
  func.func @transform_0(%arg0: i32, %arg1: i32) -> (i32, i32) {
    %c1_i32 = arith.constant 1 : i32
    %0 = arith.muli %arg0, %c1_i32 : i32
    %1 = arith.addi %0, %arg1 : i32
    %c0_i32 = arith.constant 0 : i32
    %2 = arith.minsi %1, %c0_i32 : i32
    %c0_i32_0 = arith.constant 0 : i32
    %c0_i32_1 = arith.constant 0 : i32
    return %2, %c0_i32_0 : i32, i32
  }
  func.func @transform_1(%arg0: i32, %arg1: i32) -> (i32, i32) {
    %c1_i32 = arith.constant 1 : i32
    %0 = arith.muli %arg0, %c1_i32 : i32
    %1 = arith.addi %0, %arg1 : i32
    %c0_i32 = arith.constant 0 : i32
    %2 = arith.minsi %1, %c0_i32 : i32
    %c0_i32_0 = arith.constant 0 : i32
    %c0_i32_1 = arith.constant 0 : i32
    return %2, %c0_i32_0 : i32, i32
  }
  func.func @transform_2(%arg0: i32, %arg1: i32) -> (i32, i32) {
    %c0_i32 = arith.constant 0 : i32
    %c0_i32_0 = arith.constant 0 : i32
    return %arg0, %c0_i32 : i32, i32
  }
  func.func @transform_3(%arg0: i32, %arg1: i32) -> (i32, i32) {
    %c0_i32 = arith.constant 0 : i32
    %c0_i32_0 = arith.constant 0 : i32
    return %arg0, %c0_i32 : i32, i32
  }
  func.func @transform_4(%arg0: i32, %arg1: i32) -> (i32, i32) {
    %c0_i32 = arith.constant 0 : i32
    %c0_i32_0 = arith.constant 0 : i32
    return %arg0, %c0_i32 : i32, i32
  }
}

</mosaic_0001>

<llo_original>
// kernel: dice_bce_loss.1
$region0: #{dice_bce_loss.1}
  #allocation0 [shape = 'u32[]', space=smem, size = 0x4, offset = 0x4, fixed_abs, tag = 'smem constant byte address 0x4 - core index']
  #allocation1 [shape = 'u32[144,128]{1,0:T(1,128)}', space=vmem, size = 0x12000, scoped, tag = 'internal scratch']
  %s0 = inlined_call_operand.vmem [shape: f32[16,128], index: 0, kind: input, shape index: {}]
  %s1 = inlined_call_operand.vmem [shape: f32[16,128], index: 1, kind: input, shape index: {}]
  %s2 = inlined_call_operand.vmem [shape: f32[16,128], index: 2, kind: output, shape index: {0}]
  %s3 = inlined_call_operand.vmem [shape: f32[16,128], index: 3, kind: output, shape index: {1}]
  %s4 = inlined_call_operand.vmem [shape: f32[16,128], index: 4, kind: output, shape index: {2}]
  %5 = xla_tuple %s2, %s3, %s4
  %s6 = sld [smem:[#allocation0]]
  $region69: #{dice_bce_loss.1} parent=0
    _
  %s8 = ssub.s32 1, %s6
  %s9 = scalar_select 0, %s8, %s6
  loop: start=0, step=1, limit=4
  $region2: #{dice_bce_loss.1} parent=0 // loop_pre_header
    _
  $region3: #{dice_bce_loss.1} parent=0 // loop_header
    %s11 = sphi 0, %s15
    %p12 = scmp.ge.s32.totalorder %s11, 4
    %s18 = sphi 0, %s30
    %s19 = sphi 0, %s26
    %s20 = sphi 0, %s18
    %s21 = sphi 0, %s19
    %s22 = sphi 0, %s20
    %s23 = sphi 0, %s21
    %s39 = sphi 0, %s41
    %s42 = sphi 0, %s39
    %s43 = sphi 0, %s42
    %s59 = sphi 0, %s43
    %s71 = sphi 0, %s73
    %s74 = sphi 0, %s71
    %s75 = sphi 0, %s74
    %s91 = sphi 0, %s75
    %s97 = sphi 0, %s99
    %s100 = sphi 0, %s97
    %s101 = sphi 0, %s100
    %s117 = sphi 0, %s101
    %s123 = sphi 0, %s125
    %s126 = sphi 0, %s123
    %s127 = sphi 0, %s126
    %s143 = sphi 0, %s127
    %s149 = sphi 0, %s151
    %s152 = sphi 0, %s149
    %s153 = sphi 0, %s152
    %s169 = sphi 0, %s153
  $region4: #{dice_bce_loss.1} parent=0 // loop_header_branch
    %14 = sbr.rel (%p12) target = $region8
  $region5: #{dice_bce_loss.1} parent=0 // loop_body
    %s16 = ssub.s32 %s11, 1
    %s17 = ssub.s32 %s11, 2
    %s24 = sadd.s32 1, %s19
    %p25 = scmp.ge.s32.totalorder %s24, 1
    %s26 = scalar_select %p25, 0, %s24
    %s27 = sadd.s32 1, %s18
    %s28 = scalar_select %p25, %s27, %s18
    %p29 = scmp.ge.s32.totalorder %s28, 2
    %s30 = scalar_select %p29, 0, %s28
    %s31 = sadd.s32 %s18, %s19
    %p32 = scmp.lt.s32.totalorder %s31, 0
    %s33 = scalar_select %p32, %s31, 0
    %s34 = sadd.s32 %s30, %s26
    %p35 = scmp.lt.s32.totalorder %s34, 0
    %s36 = scalar_select %p35, %s34, 0
    %s37 = ssub.s32 %s33, %s36
    %p38 = scmp.eq.s32.totalorder %s37, 0
    %s40 = sadd.s32 %s39, 1
    %s41 = scalar_select %p38, %s39, %s40
    %p44 = pneg %p38
    %p45 = scmp.eq.s32.totalorder %s11, 1
    %p46 = por %p44, %p45
    %p47 = scmp.ne.s32.totalorder %s39, %s42
    %p48 = scmp.eq.s32.totalorder %s11, 0
    %p49 = por %p47, %p48
    %p50 = scmp.ne.s32.totalorder %s39, %s42
    %p51 = scmp.eq.s32.totalorder %s16, 1
    %p52 = por %p50, %p51
    %p53 = scmp.ne.s32.totalorder %s42, %s43
    %p54 = scmp.eq.s32.totalorder %s16, 0
    %p55 = por %p53, %p54
    %p56 = scmp.ne.s32.totalorder %s42, %s43
    %p57 = scmp.eq.s32.totalorder %s17, 1
    %p58 = por %p56, %p57
    %p60 = scmp.ne.s32.totalorder %s43, %s59
    %p61 = scmp.eq.s32.totalorder %s17, 0
    %p62 = por %p60, %p61
    %s63 = sadd.s32 %s18, %s19
    %p64 = scmp.lt.s32.totalorder %s63, 0
    %s65 = scalar_select %p64, %s63, 0
    %s66 = sadd.s32 %s30, %s26
    %p67 = scmp.lt.s32.totalorder %s66, 0
    %s68 = scalar_select %p67, %s66, 0
    %s69 = ssub.s32 %s65, %s68
    %p70 = scmp.eq.s32.totalorder %s69, 0
    %s72 = sadd.s32 %s71, 1
    %s73 = scalar_select %p70, %s71, %s72
    %p76 = pneg %p70
    %p77 = scmp.eq.s32.totalorder %s11, 1
    %p78 = por %p76, %p77
    %p79 = scmp.ne.s32.totalorder %s71, %s74
    %p80 = scmp.eq.s32.totalorder %s11, 0
    %p81 = por %p79, %p80
    %p82 = scmp.ne.s32.totalorder %s71, %s74
    %p83 = scmp.eq.s32.totalorder %s16, 1
    %p84 = por %p82, %p83
    %p85 = scmp.ne.s32.totalorder %s74, %s75
    %p86 = scmp.eq.s32.totalorder %s16, 0
    %p87 = por %p85, %p86
    %p88 = scmp.ne.s32.totalorder %s74, %s75
    %p89 = scmp.eq.s32.totalorder %s17, 1
    %p90 = por %p88, %p89
    %p92 = scmp.ne.s32.totalorder %s75, %s91
    %p93 = scmp.eq.s32.totalorder %s17, 0
    %p94 = por %p92, %p93
    %s95 = ssub.s32 %s18, %s30
    %p96 = scmp.eq.s32.totalorder %s95, 0
    %s98 = sadd.s32 %s97, 1
    %s99 = scalar_select %p96, %s97, %s98
    %p102 = pneg %p96
    %p103 = scmp.eq.s32.totalorder %s11, 1
    %p104 = por %p102, %p103
    %p105 = scmp.ne.s32.totalorder %s97, %s100
    %p106 = scmp.eq.s32.totalorder %s11, 0
    %p107 = por %p105, %p106
    %p108 = scmp.ne.s32.totalorder %s97, %s100
    %p109 = scmp.eq.s32.totalorder %s16, 1
    %p110 = por %p108, %p109
    %p111 = scmp.ne.s32.totalorder %s100, %s101
    %p112 = scmp.eq.s32.totalorder %s16, 0
    %p113 = por %p111, %p112
    %p114 = scmp.ne.s32.totalorder %s100, %s101
    %p115 = scmp.eq.s32.totalorder %s17, 1
    %p116 = por %p114, %p115
    %p118 = scmp.ne.s32.totalorder %s101, %s117
    %p119 = scmp.eq.s32.totalorder %s17, 0
    %p120 = por %p118, %p119
    %s121 = ssub.s32 %s18, %s30
    %p122 = scmp.eq.s32.totalorder %s121, 0
    %s124 = sadd.s32 %s123, 1
    %s125 = scalar_select %p122, %s123, %s124
    %p128 = pneg %p122
    %p129 = scmp.eq.s32.totalorder %s11, 1
    %p130 = por %p128, %p129
    %p131 = scmp.ne.s32.totalorder %s123, %s126
    %p132 = scmp.eq.s32.totalorder %s11, 0
    %p133 = por %p131, %p132
    %p134 = scmp.ne.s32.totalorder %s123, %s126
    %p135 = scmp.eq.s32.totalorder %s16, 1
    %p136 = por %p134, %p135
    %p137 = scmp.ne.s32.totalorder %s126, %s127
    %p138 = scmp.eq.s32.totalorder %s16, 0
    %p139 = por %p137, %p138
    %p140 = scmp.ne.s32.totalorder %s126, %s127
    %p141 = scmp.eq.s32.totalorder %s17, 1
    %p142 = por %p140, %p141
    %p144 = scmp.ne.s32.totalorder %s127, %s143
    %p145 = scmp.eq.s32.totalorder %s17, 0
    %p146 = por %p144, %p145
    %s147 = ssub.s32 %s18, %s30
    %p148 = scmp.eq.s32.totalorder %s147, 0
    %s150 = sadd.s32 %s149, 1
    %s151 = scalar_select %p148, %s149, %s150
    %p154 = pneg %p148
    %p155 = scmp.eq.s32.totalorder %s11, 1
    %p156 = por %p154, %p155
    %p157 = scmp.ne.s32.totalorder %s149, %s152
    %p158 = scmp.eq.s32.totalorder %s11, 0
    %p159 = por %p157, %p158
    %p160 = scmp.ne.s32.totalorder %s149, %s152
    %p161 = scmp.eq.s32.totalorder %s16, 1
    %p162 = por %p160, %p161
    %p163 = scmp.ne.s32.totalorder %s152, %s153
    %p164 = scmp.eq.s32.totalorder %s16, 0
    %p165 = por %p163, %p164
    %p166 = scmp.ne.s32.totalorder %s152, %s153
    %p167 = scmp.eq.s32.totalorder %s17, 1
    %p168 = por %p166, %p167
    %p170 = scmp.ne.s32.totalorder %s153, %s169
    %p171 = scmp.eq.s32.totalorder %s17, 0
    %p172 = por %p170, %p171
    %p173 = scmp.le.s32.totalorder 1, %s11
    %p174 = scmp.lt.s32.totalorder %s11, 3
    %p175 = pnand %p173, %p174
    %p176 = pneg %p175
    // Predicated region
    $region9: #{dice_bce_loss.1} parent=5 // pred_check
      _
    $region10: #{dice_bce_loss.1} parent=5 // pred_check_branch
      %178 = sbr.rel (%p175) target = $region12
    $region11: #{dice_bce_loss.1} parent=5 // pred_region
      %s179 = ssub.s32 %s11, 1
    $region12: #{dice_bce_loss.1} parent=5 // pred_fallthru
      _
    %p180 = scmp.lt.s32.totalorder %s11, 2
    // Predicated region
    $region13: #{dice_bce_loss.1} parent=5 // pred_check
      %p181 = pneg %p180
    $region14: #{dice_bce_loss.1} parent=5 // pred_check_branch
      %183 = sbr.rel (%p181) target = $region16
    $region15: #{dice_bce_loss.1} parent=5 // pred_region
      // Predicated region
      $region17: #{dice_bce_loss.1} parent=15 // pred_check
        %p184 = pneg %p49
      $region18: #{dice_bce_loss.1} parent=15 // pred_check_branch
        %186 = sbr.rel (%p184) target = $region20
      $region19: #{dice_bce_loss.1} parent=15 // pred_region
        %s187 = sadd.s32 %s18, %s19
        %p188 = scmp.lt.s32.totalorder %s187, 0
        %s189 = scalar_select %p188, %s187, 0
        %s190 = smul.u32 2, %s189
        %p191 = scmp.lt.s32.totalorder %s190, 1
        %s192 = scalar_select %p191, %s190, 1
        %s193 = smul.addr %s192, 8
        %s194 = scalar_lea.vmem %s0, %s193
        %s195 = sadd.s32 %s18, %s19
        %p196 = scmp.lt.s32.totalorder %s195, 0
        %s197 = scalar_select %p196, %s195, 0
        %s198 = smul.u32 2, %s197
      $region20: #{dice_bce_loss.1} parent=15 // pred_fallthru
        _
      // Predicated region
      $region21: #{dice_bce_loss.1} parent=15 // pred_check
        %p199 = pneg %p81
      $region22: #{dice_bce_loss.1} parent=15 // pred_check_branch
        %201 = sbr.rel (%p199) target = $region24
      $region23: #{dice_bce_loss.1} parent=15 // pred_region
        %s202 = sadd.s32 %s18, %s19
        %p203 = scmp.lt.s32.totalorder %s202, 0
        %s204 = scalar_select %p203, %s202, 0
        %s205 = smul.u32 2, %s204
        %p206 = scmp.lt.s32.totalorder %s205, 1
        %s207 = scalar_select %p206, %s205, 1
        %s208 = smul.addr %s207, 8
        %s209 = scalar_lea.vmem %s1, %s208
        %s210 = sadd.s32 %s18, %s19
        %p211 = scmp.lt.s32.totalorder %s210, 0
        %s212 = scalar_select %p211, %s210, 0
        %s213 = smul.u32 2, %s212
      $region24: #{dice_bce_loss.1} parent=15 // pred_fallthru
        _
    $region16: #{dice_bce_loss.1} parent=5 // pred_fallthru
      _
    %p214 = scmp.le.s32.totalorder 1, %s11
    %p215 = scmp.lt.s32.totalorder %s11, 3
    %p216 = pnand %p214, %p215
    %p217 = pneg %p216
    // Predicated region
    $region25: #{dice_bce_loss.1} parent=5 // pred_check
      _
    $region26: #{dice_bce_loss.1} parent=5 // pred_check_branch
      %219 = sbr.rel (%p216) target = $region28
    $region27: #{dice_bce_loss.1} parent=5 // pred_region
      %s220 = ssub.s32 %s11, 1
      %s221 = sadd.s32 %s20, %s21
      %p222 = scmp.lt.s32.totalorder %s221, 0
      %s223 = scalar_select %p222, %s221, 0
      %s224 = smul.u32 2, %s223
      %p225 = scmp.lt.s32.totalorder %s224, 1
      %s226 = scalar_select %p225, %s224, 1
      %s227 = smul.addr %s226, 8
      %s228 = scalar_lea.vmem %s0, %s227
      %p229 = pneg %p55
      %p230 = pneg %p52
      %s231 = sadd.s32 %s20, %s21
      %p232 = scmp.lt.s32.totalorder %s231, 0
      %s233 = scalar_select %p232, %s231, 0
      %s234 = smul.u32 2, %s233
      %p235 = scmp.lt.s32.totalorder %s234, 1
      %s236 = scalar_select %p235, %s234, 1
      %s237 = smul.addr %s236, 8
      %s238 = scalar_lea.vmem %s1, %s237
      %p239 = pneg %p87
      %p240 = pneg %p84
      %p241 = pneg %p113
      %p242 = pneg %p110
      %p243 = scmp.lt.s32.totalorder %s20, 1
      %s244 = scalar_select %p243, %s20, 1
      %s245 = smul.addr %s244, 8
      %s246 = scalar_lea.vmem %s2, %s245
      %p247 = pneg %p139
      %p248 = pneg %p136
      %p249 = scmp.lt.s32.totalorder %s20, 1
      %s250 = scalar_select %p249, %s20, 1
      %s251 = smul.addr %s250, 8
      %s252 = scalar_lea.vmem %s3, %s251
      %p253 = pneg %p165
      %p254 = pneg %p162
      %p255 = scmp.lt.s32.totalorder %s20, 1
      %s256 = scalar_select %p255, %s20, 1
      %s257 = smul.addr %s256, 8
      %s258 = scalar_lea.vmem %s4, %s257
      %s259 = sadd.s32 %s20, %s21
      %p260 = scmp.lt.s32.totalorder %s259, 0
      %s261 = scalar_select %p260, %s259, 0
      %s262 = smul.u32 2, %s261
      %p263 = scmp.lt.s32.totalorder %s262, 1
      %s264 = scalar_select %p263, %s262, 1
      %s265 = smul.addr %s264, 8
      %s266 = scalar_lea.vmem %s0, %s265
      %s267 = sadd.s32 %s20, %s21
      %p268 = scmp.lt.s32.totalorder %s267, 0
      %s269 = scalar_select %p268, %s267, 0
      %s270 = smul.u32 2, %s269
      %s271 = sadd.s32 %s20, %s21
      %p272 = scmp.lt.s32.totalorder %s271, 0
      %s273 = scalar_select %p272, %s271, 0
      %s274 = smul.u32 2, %s273
      %p275 = scmp.lt.s32.totalorder %s274, 1
      %s276 = scalar_select %p275, %s274, 1
      %s277 = smul.addr %s276, 8
      %s278 = scalar_lea.vmem %s1, %s277
      %s279 = sadd.s32 %s20, %s21
      %p280 = scmp.lt.s32.totalorder %s279, 0
      %s281 = scalar_select %p280, %s279, 0
      %s282 = smul.u32 2, %s281
      %p283 = scmp.lt.s32.totalorder %s20, 1
      %s284 = scalar_select %p283, %s20, 1
      %s285 = smul.addr %s284, 8
      %s286 = scalar_lea.vmem %s2, %s285
      %p287 = scmp.lt.s32.totalorder %s20, 1
      %s288 = scalar_select %p287, %s20, 1
      %s289 = smul.addr %s288, 8
      %s290 = scalar_lea.vmem %s3, %s289
      %p291 = scmp.lt.s32.totalorder %s20, 1
      %s292 = scalar_select %p291, %s20, 1
      %s293 = smul.addr %s292, 8
      %s294 = scalar_lea.vmem %s4, %s293
      %p295 = scmp.eq.s32.totalorder %s21, 0
      // Predicated region
      $region29: #{dice_bce_loss.1} parent=27 // pred_check
        %p296 = pneg %p295
      $region30: #{dice_bce_loss.1} parent=27 // pred_check_branch
        %298 = sbr.rel (%p296) target = $region32
      $region31: #{dice_bce_loss.1} parent=27 // pred_region
        %299 = vst [vmem:[%s286] sm:$0xff] 0.0
        %300 = vst [vmem:[%s290] sm:$0xff] 0.0
        %301 = vst [vmem:[%s294] sm:$0xff] 0.0
      $region32: #{dice_bce_loss.1} parent=27 // pred_fallthru
        _
      %s302 = sadd.s32 %s20, %s21
      %s303 = smul.u32 %s302, 16
      %v304 = vld [vmem:[%s266] sm:$0xff]
      %v305 = vld [vmem:[%s266 + $0x8] sm:$0xff]
      %v306 = vld [vmem:[%s278] sm:$0xff]
      %v307 = vld [vmem:[%s278 + $0x8] sm:$0xff]
      %s308 = sadd.s32 %s303, 16
      %p309 = scmp.gt.s32.totalorder %s308, 16
      %p310 = scmp.le.s32.totalorder %s308, 16
      // Predicated region
      $region33: #{dice_bce_loss.1} parent=27 // pred_check
        %p311 = pneg %p310
      $region34: #{dice_bce_loss.1} parent=27 // pred_check_branch
        %313 = sbr.rel (%p311) target = $region36
      $region35: #{dice_bce_loss.1} parent=27 // pred_region
        %v314 = vmul.f32 %v304, 0.5
        %v315 = vmul.f32 %v305, 0.5
        %v316 = vtanh.pop %v314
        %v317 = vtanh.pop %v315
        %v318 = vmul.f32 %v316, 0.5
        %v319 = vmul.f32 %v317, 0.5
        %v320 = vadd.f32 %v318, 0.5
        %v321 = vadd.f32 %v319, 0.5
        %v322 = vmax.f32 %v304, 0.0
        %v323 = vmax.f32 %v305, 0.0
        %v324 = vmul.f32 %v304, %v306
        %v325 = vmul.f32 %v305, %v307
        %v326 = vsub.f32 %v322, %v324
        %v327 = vsub.f32 %v323, %v325
        %v328 = vsub.f32 1.0, %v320
        %v329 = vsub.f32 1.0, %v321
        %v330 = vmax.f32 %v320, %v328
        %v331 = vmax.f32 %v321, %v329
        %v332 = vlog2.pop %v330
        %v333 = vmul.f32 %v332, 0.6931472
        %v334 = vlog2.pop %v331
        %v335 = vmul.f32 %v334, 0.6931472
        %v336 = vsub.f32 %v326, %v333
        %v337 = vsub.f32 %v327, %v335
        %v338 = vld [vmem:[%s286] sm:$0xff]
        %v339 = vadd.f32 %v336, %v337
        %v340 = vadd.f32 %v338, %v339
        %341 = vst [vmem:[%s286] sm:$0xff] %v340
        %v342 = vld [vmem:[%s290] sm:$0xff]
        %v343 = vmul.f32 %v320, %v306
        %v344 = vmul.f32 %v321, %v307
        %v345 = vadd.f32 %v343, %v344
        %v346 = vadd.f32 %v342, %v345
        %347 = vst [vmem:[%s290] sm:$0xff] %v346
        %v348 = vld [vmem:[%s294] sm:$0xff]
        %v349 = vadd.f32 %v320, %v306
        %v350 = vadd.f32 %v321, %v307
        %v351 = vadd.f32 %v349, %v350
        %v352 = vadd.f32 %v348, %v351
        %353 = vst [vmem:[%s294] sm:$0xff] %v352
      $region36: #{dice_bce_loss.1} parent=27 // pred_fallthru
        _
      // Predicated region
      $region37: #{dice_bce_loss.1} parent=27 // pred_check
        %p354 = pneg %p309
      $region38: #{dice_bce_loss.1} parent=27 // pred_check_branch
        %356 = sbr.rel (%p354) target = $region40
      $region39: #{dice_bce_loss.1} parent=27 // pred_region
        %v357 = vlaneseq
        %v358 = vshrl.u32 %v357, 7
        %v359 = vadd.s32 %v358, 8
        %v360 = vstv %s303
        %v361 = vadd.s32 %v358, %v360
        %v362 = vadd.s32 %v359, %v360
        %vm363 = vcmp.lt.s32.totalorder %v361, 16
        %vm364 = vcmp.lt.s32.totalorder %v362, 16
        %v365 = vsel %vm363, %v304, -10000.0
        %v366 = vsel %vm364, %v305, -10000.0
        %v367 = vsel %vm363, %v306, 0.0
        %v368 = vsel %vm364, %v307, 0.0
        %v369 = vmul.f32 %v365, 0.5
        %v370 = vmul.f32 %v366, 0.5
        %v371 = vtanh.pop %v369
        %v372 = vtanh.pop %v370
        %v373 = vmul.f32 %v371, 0.5
        %v374 = vmul.f32 %v372, 0.5
        %v375 = vadd.f32 %v373, 0.5
        %v376 = vadd.f32 %v374, 0.5
        %v377 = vmax.f32 %v365, 0.0
        %v378 = vmax.f32 %v366, 0.0
        %v379 = vmul.f32 %v365, %v367
        %v380 = vmul.f32 %v366, %v368
        %v381 = vsub.f32 %v377, %v379
        %v382 = vsub.f32 %v378, %v380
        %v383 = vsub.f32 1.0, %v375
        %v384 = vsub.f32 1.0, %v376
        %v385 = vmax.f32 %v375, %v383
        %v386 = vmax.f32 %v376, %v384
        %v387 = vlog2.pop %v385
        %v388 = vmul.f32 %v387, 0.6931472
        %v389 = vlog2.pop %v386
        %v390 = vmul.f32 %v389, 0.6931472
        %v391 = vsub.f32 %v381, %v388
        %v392 = vsub.f32 %v382, %v390
        %v393 = vld [vmem:[%s286] sm:$0xff]
        %v394 = vadd.f32 %v391, %v392
        %v395 = vadd.f32 %v393, %v394
        %396 = vst [vmem:[%s286] sm:$0xff] %v395
        %v397 = vld [vmem:[%s290] sm:$0xff]
        %v398 = vmul.f32 %v375, %v367
        %v399 = vmul.f32 %v376, %v368
        %v400 = vadd.f32 %v398, %v399
        %v401 = vadd.f32 %v397, %v400
        %402 = vst [vmem:[%s290] sm:$0xff] %v401
        %v403 = vld [vmem:[%s294] sm:$0xff]
        %v404 = vadd.f32 %v375, %v367
        %v405 = vadd.f32 %v376, %v368
        %v406 = vadd.f32 %v404, %v405
        %v407 = vadd.f32 %v403, %v406
        %408 = vst [vmem:[%s294] sm:$0xff] %v407
      $region40: #{dice_bce_loss.1} parent=27 // pred_fallthru
        _
      %p409 = scmp.lt.s32.totalorder %s20, 1
      %s410 = scalar_select %p409, %s20, 1
      %s411 = smul.addr %s410, 8
      %s412 = scalar_lea.vmem %s2, %s411
      %p413 = scmp.lt.s32.totalorder %s20, 1
      %s414 = scalar_select %p413, %s20, 1
      %s415 = smul.addr %s414, 8
      %s416 = scalar_lea.vmem %s3, %s415
      %p417 = scmp.lt.s32.totalorder %s20, 1
      %s418 = scalar_select %p417, %s20, 1
      %s419 = smul.addr %s418, 8
      %s420 = scalar_lea.vmem %s4, %s419
      // Predicated region
      $region41: #{dice_bce_loss.1} parent=27 // pred_check
        %p421 = pneg %p110
      $region42: #{dice_bce_loss.1} parent=27 // pred_check_branch
        %423 = sbr.rel (%p421) target = $region44
      $region43: #{dice_bce_loss.1} parent=27 // pred_region
        _
      $region44: #{dice_bce_loss.1} parent=27 // pred_fallthru
        _
      // Predicated region
      $region45: #{dice_bce_loss.1} parent=27 // pred_check
        %p424 = pneg %p136
      $region46: #{dice_bce_loss.1} parent=27 // pred_check_branch
        %426 = sbr.rel (%p424) target = $region48
      $region47: #{dice_bce_loss.1} parent=27 // pred_region
        _
      $region48: #{dice_bce_loss.1} parent=27 // pred_fallthru
        _
      // Predicated region
      $region49: #{dice_bce_loss.1} parent=27 // pred_check
        %p427 = pneg %p162
      $region50: #{dice_bce_loss.1} parent=27 // pred_check_branch
        %429 = sbr.rel (%p427) target = $region52
      $region51: #{dice_bce_loss.1} parent=27 // pred_region
        _
      $region52: #{dice_bce_loss.1} parent=27 // pred_fallthru
        _
    $region28: #{dice_bce_loss.1} parent=5 // pred_fallthru
      _
    %p430 = scmp.le.s32.totalorder 2, %s11
    // Predicated region
    $region53: #{dice_bce_loss.1} parent=5 // pred_check
      %p431 = pneg %p430
    $region54: #{dice_bce_loss.1} parent=5 // pred_check_branch
      %433 = sbr.rel (%p431) target = $region56
    $region55: #{dice_bce_loss.1} parent=5 // pred_region
      %s434 = ssub.s32 %s11, 2
      // Predicated region
      $region57: #{dice_bce_loss.1} parent=55 // pred_check
        %p435 = pneg %p116
      $region58: #{dice_bce_loss.1} parent=55 // pred_check_branch
        %437 = sbr.rel (%p435) target = $region60
      $region59: #{dice_bce_loss.1} parent=55 // pred_region
        %p438 = scmp.lt.s32.totalorder %s22, 1
        %s439 = scalar_select %p438, %s22, 1
        %s440 = smul.addr %s439, 8
        %s441 = scalar_lea.vmem %s2, %s440
      $region60: #{dice_bce_loss.1} parent=55 // pred_fallthru
        _
      // Predicated region
      $region61: #{dice_bce_loss.1} parent=55 // pred_check
        %p442 = pneg %p142
      $region62: #{dice_bce_loss.1} parent=55 // pred_check_branch
        %444 = sbr.rel (%p442) target = $region64
      $region63: #{dice_bce_loss.1} parent=55 // pred_region
        %p445 = scmp.lt.s32.totalorder %s22, 1
        %s446 = scalar_select %p445, %s22, 1
        %s447 = smul.addr %s446, 8
        %s448 = scalar_lea.vmem %s3, %s447
      $region64: #{dice_bce_loss.1} parent=55 // pred_fallthru
        _
      // Predicated region
      $region65: #{dice_bce_loss.1} parent=55 // pred_check
        %p449 = pneg %p168
      $region66: #{dice_bce_loss.1} parent=55 // pred_check_branch
        %451 = sbr.rel (%p449) target = $region68
      $region67: #{dice_bce_loss.1} parent=55 // pred_region
        %p452 = scmp.lt.s32.totalorder %s22, 1
        %s453 = scalar_select %p452, %s22, 1
        %s454 = smul.addr %s453, 8
        %s455 = scalar_lea.vmem %s4, %s454
      $region68: #{dice_bce_loss.1} parent=55 // pred_fallthru
        _
    $region56: #{dice_bce_loss.1} parent=5 // pred_fallthru
      _
  $region6: #{dice_bce_loss.1} parent=0 // loop_footer
    %s15 = sadd.s32 1, %s11
  $region7: #{dice_bce_loss.1} parent=0 // loop_footer_branch
    %10 = sbr.rel target = $region3
  $region8: #{dice_bce_loss.1} parent=0 // loop_exit
    _

</llo_original>
